<compile_context>
chip_gen: v6e
topology: v6e:2x2x1
jax: 0.10.0
libtpu: 0.0.40
codegen_flags: <defaults>
</compile_context>

<pallas_src>
import functools
import math

import jax
import jax.numpy as jnp
from jax import lax
from jax.experimental import pallas as pl
from jax.experimental.pallas import tpu as pltpu


def _round_up(v, m):
    return -(-v // m) * m


def _vmem_bytes(tile_l, cin_sub, cout_sub, K, stride):
    crows = cin_sub if stride == 1 else K * cin_sub
    n_x = 2 if stride == 1 else 1
    blocks = (n_x * crows + cout_sub) * tile_l * 4      # per-step input/output tiles
    patches = K * cin_sub * tile_l * 4                  # in-VMEM patch matrix
    w = cout_sub * K * cin_sub * 4
    return 2 * blocks + patches + w                     # x2 for double-buffering


def _pick_tile_l(l_out, cin_sub, cout_sub, K, stride, budget=12 << 20):
    # Biggest lane tile that keeps the working set small even on v7x (64 MiB).
    tile = min(512, _round_up(l_out, 128))
    while tile > 128 and _vmem_bytes(tile, cin_sub, cout_sub, K, stride) > budget:
        tile -= 128
    return tile


# -----------------------------------------------------------------------------
# Pass 1: conv tile (MXU matmul on an in-VMEM patch matrix) + BN partial sums.
# In-kernel layout: channels on sublanes, output length on lanes (lane dense).
# -----------------------------------------------------------------------------
def _conv_stats_kernel(w_ref, *refs, K, tile_l, l_out, shift_path, mm_dtype,
                       mask_tail):
    if shift_path:
        # stride == 1: build the patch matrix from the compact x tile + halo
        x_ref, xn_ref, conv_ref, psum_ref, psumsq_ref = refs
        xt = jnp.concatenate([x_ref[0], xn_ref[0]], axis=1)   # (Cin_sub, 2*tile_l)
        # rows ordered (k, cin) to match w_ref's column order
        P = jnp.concatenate([xt[:, k:k + tile_l] for k in range(K)], axis=0)
    else:
        # stride > 1: patches pre-expanded in the wrapper, rows already (k, cin)
        x_ref, conv_ref, psum_ref, psumsq_ref = refs
        P = x_ref[0]                                          # (K*Cin_sub, tile_l)

    conv = jnp.dot(w_ref[...].astype(mm_dtype), P.astype(mm_dtype),
                   preferred_element_type=jnp.float32)        # (Cout_sub, tile_l)
    conv_ref[0, :, :] = conv

    # BatchNorm partial statistics; mask lanes past the true L_out on the tail.
    if mask_tail:
        lt = pl.program_id(1)
        lane = lax.broadcasted_iota(jnp.int32, conv.shape, 1)
        conv = jnp.where(lane < (l_out - lt * tile_l), conv, 0.0)
    psum_ref[0, 0, :, :] = jnp.sum(conv, axis=1, keepdims=True)
    psumsq_ref[0, 0, :, :] = jnp.sum(conv * conv, axis=1, keepdims=True)


# -----------------------------------------------------------------------------
# Pass 2: y = conv * scale + shift (folded BN), + residual, activation.
# -----------------------------------------------------------------------------
def _bn_act_kernel(*refs, residual, act):
    if residual:
        conv_ref, scale_ref, shift_ref, resid_ref, out_ref = refs
    else:
        conv_ref, scale_ref, shift_ref, out_ref = refs
    y = conv_ref[0] * scale_ref[...] + shift_ref[...]
    if residual:
        y = y + resid_ref[0]
    if act == "ReLU":
        y = jnp.maximum(y, 0.0)
    else:  # Tanh
        y = jnp.tanh(y)
    out_ref[0, :, :] = y.astype(out_ref.dtype)


def conv1d_block(x, weight, bias, gamma, beta, *, stride, padding,
                 residual=False, act="ReLU", eps=1e-5,
                 matmul_dtype=jnp.float32, tile_l=None):
    """Forward of the PyTorch `Conv1d` block (NCL in, NCL out).

    Conv1d(cin, cout, K, stride, padding) -> BatchNorm1d (training-mode batch
    statistics, biased variance, gamma/beta affine) -> optional residual add
    -> ReLU/Tanh.  `bias` is accepted for interface parity but is exactly
    cancelled by the BatchNorm mean subtraction, so it is not read.
    """
    if act not in ("ReLU", "Tanh"):
        raise ValueError(f"unsupported activation: {act}")
    del bias  # exactly cancelled by training-mode BatchNorm mean subtraction

    x = x.astype(jnp.float32)
    weight = weight.astype(jnp.float32)
    N, Cin, L = x.shape
    Cout, wcin, K = weight.shape
    assert wcin == Cin
    L_out = (L + 2 * padding - K) // stride + 1
    assert L_out > 0
    M = N * L_out
    Cin_sub = _round_up(Cin, 8)      # f32 sublane padding
    Cout_sub = _round_up(Cout, 8)

    if tile_l is None:
        tile_l = _pick_tile_l(L_out, Cin_sub, Cout_sub, K, stride)
    assert tile_l % 128 == 0
    num_lt = -(-L_out // tile_l)
    L_out_pad = num_lt * tile_l
    est_bytes = _vmem_bytes(tile_l, Cin_sub, Cout_sub, K, stride)
    vmem_limit = int(min(max(4 * est_bytes, 16 << 20), 56 << 20))

    # Weight: (Cout, Cin, K) -> (Cout_sub, K*Cin_sub), columns (k, cin)-major.
    w_pad = jnp.zeros((Cout_sub, Cin_sub, K), jnp.float32)
    w_pad = w_pad.at[:Cout, :Cin, :].set(weight)
    w_mat = w_pad.transpose(0, 2, 1).reshape(Cout_sub, K * Cin_sub)

    shift_path = (stride == 1)
    if shift_path:
        assert K - 1 <= tile_l, "kernel size must not exceed the L tile"
        L_in_pad = (num_lt + 1) * tile_l          # +1 tile: halo for the k shifts
        x_p = jnp.pad(x, ((0, 0), (0, Cin_sub - Cin),
                          (padding, L_in_pad - L - padding)))
        crows = Cin_sub
        conv_inputs = (w_mat, x_p, x_p)
        in_specs = [
            pl.BlockSpec((Cout_sub, K * Cin_sub), lambda n, lt: (0, 0)),
            pl.BlockSpec((1, crows, tile_l), lambda n, lt: (n, 0, lt)),
            pl.BlockSpec((1, crows, tile_l), lambda n, lt: (n, 0, lt + 1)),
        ]
        x_read_bytes = 2 * x_p.size * 4
    else:
        # TODO(synk): stride > 1 falls back to a wrapper-side (k, cin) expansion
        # of x (K-fold HBM read); an in-kernel strided lane gather would remove
        # it.  stride == 1 (the common case in this model) avoids the expansion.
        x_p = jnp.pad(x, ((0, 0), (0, Cin_sub - Cin), (padding, padding)))
        xk = jnp.concatenate(
            [x_p[:, :, k:k + (L_out - 1) * stride + 1:stride] for k in range(K)],
            axis=1)                                # (N, K*Cin_sub, L_out)
        xk = jnp.pad(xk, ((0, 0), (0, 0), (0, L_out_pad - L_out)))
        crows = K * Cin_sub
        conv_inputs = (w_mat, xk)
        in_specs = [
            pl.BlockSpec((Cout_sub, K * Cin_sub), lambda n, lt: (0, 0)),
            pl.BlockSpec((1, crows, tile_l), lambda n, lt: (n, 0, lt)),
        ]
        x_read_bytes = xk.size * 4

    mm_dtype = jnp.dtype(matmul_dtype)
    kernel1 = functools.partial(
        _conv_stats_kernel, K=K, tile_l=tile_l, l_out=L_out,
        shift_path=shift_path, mm_dtype=mm_dtype,
        mask_tail=(L_out % tile_l != 0))

    conv_bytes = N * Cout_sub * L_out_pad * 4
    cost1 = pl.CostEstimate(
        flops=int(2.0 * M * Cin * K * Cout),
        transcendentals=0,
        bytes_accessed=int(x_read_bytes + w_mat.size * 4 + conv_bytes
                           + 2 * N * num_lt * Cout_sub * 4))
    cparams = pltpu.CompilerParams(
        dimension_semantics=("parallel", "parallel"),
        vmem_limit_bytes=vmem_limit)

    conv_buf, psum, psumsq = pl.pallas_call(
        kernel1,
        out_shape=(
            jax.ShapeDtypeStruct((N, Cout_sub, L_out_pad), jnp.float32),
            jax.ShapeDtypeStruct((N, num_lt, Cout_sub, 1), jnp.float32),
            jax.ShapeDtypeStruct((N, num_lt, Cout_sub, 1), jnp.float32)),
        grid=(N, num_lt),
        in_specs=in_specs,
        out_specs=(
            pl.BlockSpec((1, Cout_sub, tile_l), lambda n, lt: (n, 0, lt)),
            pl.BlockSpec((1, 1, Cout_sub, 1), lambda n, lt: (n, lt, 0, 0)),
            pl.BlockSpec((1, 1, Cout_sub, 1), lambda n, lt: (n, lt, 0, 0))),
        compiler_params=cparams,
        cost_estimate=cost1,
    )(*conv_inputs)

    # ---- BatchNorm statistics finalize (tiny, plain JAX) --------------------
    ssum = jnp.sum(psum[..., 0], axis=(0, 1))          # (Cout_sub,)
    ssq = jnp.sum(psumsq[..., 0], axis=(0, 1))
    mean = ssum / M
    var = jnp.maximum(ssq / M - mean * mean, 0.0)      # biased (training-mode BN)
    inv_std = lax.rsqrt(var + eps)
    g = jnp.zeros((Cout_sub,), jnp.float32).at[:Cout].set(gamma.astype(jnp.float32))
    b = jnp.zeros((Cout_sub,), jnp.float32).at[:Cout].set(beta.astype(jnp.float32))
    scale = (g * inv_std).reshape(Cout_sub, 1)
    shift = (b - mean * g * inv_std).reshape(Cout_sub, 1)

    # ---- pass 2: normalize + residual + activation ---------------------------
    p2_inputs = [conv_buf, scale, shift]
    p2_specs = [
        pl.BlockSpec((1, Cout_sub, tile_l), lambda n, lt: (n, 0, lt)),
        pl.BlockSpec((Cout_sub, 1), lambda n, lt: (0, 0)),
        pl.BlockSpec((Cout_sub, 1), lambda n, lt: (0, 0)),
    ]
    if residual:
        assert Cin == Cout and L_out == L, "residual requires matching shapes"
        resid = jnp.pad(x, ((0, 0), (0, Cout_sub - Cin), (0, L_out_pad - L)))
        p2_inputs.append(resid)
        p2_specs.append(pl.BlockSpec((1, Cout_sub, tile_l),
                                     lambda n, lt: (n, 0, lt)))

    kernel2 = functools.partial(_bn_act_kernel, residual=residual, act=act)
    cost2 = pl.CostEstimate(
        flops=int((4 + (1 if residual else 0)) * N * Cout_sub * L_out_pad),
        transcendentals=int(N * Cout_sub * L_out_pad) if act == "Tanh" else 0,
        bytes_accessed=int((2 + (1 if residual else 0)) * conv_bytes))

    out_full = pl.pallas_call(
        kernel2,
        out_shape=jax.ShapeDtypeStruct((N, Cout_sub, L_out_pad), jnp.float32),
        grid=(N, num_lt),
        in_specs=p2_specs,
        out_specs=pl.BlockSpec((1, Cout_sub, tile_l), lambda n, lt: (n, 0, lt)),
        input_output_aliases={0: 0},          # write the result over conv_buf
        compiler_params=cparams,
        cost_estimate=cost2,
    )(*p2_inputs)

    # Slice away the sublane/lane padding -> PyTorch NCL output.
    return out_full[:, :Cout, :L_out]


# ------------------------------ pure-JAX reference ----------------------------
def _reference(x, weight, bias, gamma, beta, *, stride, padding, residual,
               act, eps=1e-5):
    y = lax.conv_general_dilated(
        x, weight, window_strides=(stride,), padding=[(padding, padding)],
        dimension_numbers=("NCH", "OIH", "NCH"))
    y = y + bias[None, :, None]
    mean = jnp.mean(y, axis=(0, 2), keepdims=True)
    var = jnp.mean((y - mean) ** 2, axis=(0, 2), keepdims=True)
    y = (y - mean) * lax.rsqrt(var + eps) * gamma[None, :, None] \
        + beta[None, :, None]
    if residual:
        y = y + x
    return jnp.maximum(y, 0.0) if act == "ReLU" else jnp.tanh(y)


if __name__ == "__main__":
    key = jax.random.PRNGKey(0)
    N, Cin, Cout, L, K = 2, 4, 4, 16, 5
    padding = 2

    k1, k2, k3 = jax.random.split(key, 3)
    x = jax.random.normal(k1, (N, Cin, L), jnp.float32)
    fan_in = Cin * K
    weight = jax.random.normal(k2, (Cout, Cin, K), jnp.float32) / math.sqrt(fan_in)
    bias = jax.random.normal(k3, (Cout,), jnp.float32) * 0.1
    gamma = jnp.ones((Cout,), jnp.float32)
    beta = jnp.zeros((Cout,), jnp.float32)

    configs = [
        dict(stride=1, padding=padding, residual=True, act="ReLU"),
        dict(stride=1, padding=padding, residual=False, act="Tanh"),
        dict(stride=2, padding=padding, residual=False, act="ReLU"),
    ]
    outs = []
    for cfg in configs:
        fwd = jax.jit(functools.partial(conv1d_block, **cfg))
        out = fwd(x, weight, bias, gamma, beta)
        jax.block_until_ready(out)
        ref = _reference(x, weight, bias, gamma, beta, **cfg)
        l_out = (L + 2 * cfg["padding"] - K) // cfg["stride"] + 1
        assert out.shape == (N, Cout, l_out), out.shape
        assert jnp.allclose(out, ref, atol=1e-3, rtol=1e-3), \
            float(jnp.max(jnp.abs(out - ref)))
        outs.append(out)

    jax.block_until_ready(outs)
    print("KERNEL_OK")
</pallas_src>

<mosaic_0001>
module attributes {stable_mosaic.version = 11 : i64} {
  func.func @_conv_stats_kernel(%arg0: i32, %arg1: i32, %arg2: memref<8x40xf32, #tpu.memory_space<vmem>>, %arg3: memref<1x8x128xf32, #tpu.memory_space<vmem>>, %arg4: memref<1x8x128xf32, #tpu.memory_space<vmem>>, %arg5: memref<1x8x128xf32, #tpu.memory_space<vmem>>, %arg6: memref<1x1x8x1xf32, #tpu.memory_space<vmem>>, %arg7: memref<1x1x8x1xf32, #tpu.memory_space<vmem>>) attributes {dimension_semantics = [#tpu.dimension_semantics<parallel>, #tpu.dimension_semantics<parallel>], iteration_bounds = array<i64: 2, 1>, scalar_prefetch = 0 : i64, scratch_operands = 0 : i64, tpu.core_type = #tpu.core_type<tc>, window_params = [{pipeline_mode = #tpu.pipeline_mode<synchronous>, transform_indices = @transform_0, window_bounds = array<i64: 8, 40>}, {transform_indices = @transform_1, window_bounds = array<i64: 1, 8, 128>}, {transform_indices = @transform_2, window_bounds = array<i64: 1, 8, 128>}, {transform_indices = @transform_3, window_bounds = array<i64: 1, 8, 128>}, {transform_indices = @transform_4, window_bounds = array<i64: 1, 1, 8, 1>}, {transform_indices = @transform_5, window_bounds = array<i64: 1, 1, 8, 1>}]} {
    %c0 = arith.constant 0 : index
    %c0_0 = arith.constant 0 : index
    %c0_1 = arith.constant 0 : index
    %0 = vector.load %arg3[%c0, %c0_0, %c0_1] : memref<1x8x128xf32, #tpu.memory_space<vmem>>, vector<1x8x128xf32>
    %1 = vector.shape_cast %0 : vector<1x8x128xf32> to vector<8x128xf32>
    %c0_2 = arith.constant 0 : index
    %c0_3 = arith.constant 0 : index
    %c0_4 = arith.constant 0 : index
    %2 = vector.load %arg4[%c0_2, %c0_3, %c0_4] : memref<1x8x128xf32, #tpu.memory_space<vmem>>, vector<1x8x128xf32>
    %3 = vector.shape_cast %2 : vector<1x8x128xf32> to vector<8x128xf32>
    %4 = tpu.concatenate %1, %3 in 1 : vector<8x128xf32>, vector<8x128xf32> -> vector<8x256xf32>
    %5 = vector.extract_strided_slice %4 {offsets = [0, 0], sizes = [8, 128], strides = [1, 1]} : vector<8x256xf32> to vector<8x128xf32>
    %6 = vector.extract_strided_slice %4 {offsets = [0, 1], sizes = [8, 128], strides = [1, 1]} : vector<8x256xf32> to vector<8x128xf32>
    %7 = vector.extract_strided_slice %4 {offsets = [0, 2], sizes = [8, 128], strides = [1, 1]} : vector<8x256xf32> to vector<8x128xf32>
    %8 = vector.extract_strided_slice %4 {offsets = [0, 3], sizes = [8, 128], strides = [1, 1]} : vector<8x256xf32> to vector<8x128xf32>
    %9 = vector.extract_strided_slice %4 {offsets = [0, 4], sizes = [8, 128], strides = [1, 1]} : vector<8x256xf32> to vector<8x128xf32>
    %10 = tpu.concatenate %5, %6, %7, %8, %9 in 0 : vector<8x128xf32>, vector<8x128xf32>, vector<8x128xf32>, vector<8x128xf32>, vector<8x128xf32> -> vector<40x128xf32>
    %c0_5 = arith.constant 0 : index
    %c0_6 = arith.constant 0 : index
    %11 = vector.load %arg2[%c0_5, %c0_6] : memref<8x40xf32, #tpu.memory_space<vmem>>, vector<8x40xf32>
    %cst = arith.constant dense<0.000000e+00> : vector<8x128xf32>
    %12 = tpu.matmul %11, %10, %cst {dimension_numbers = #tpu.dot_dimension_numbers<[1], [0], [0], [1], [0, 0, 1, 1], [], []>} : vector<8x40xf32>, vector<40x128xf32>, vector<8x128xf32> -> vector<8x128xf32>
    %c0_7 = arith.constant 0 : index
    %c0_8 = arith.constant 0 : index
    %c0_9 = arith.constant 0 : index
    %13 = vector.load %arg5[%c0_7, %c0_8, %c0_9] : memref<1x8x128xf32, #tpu.memory_space<vmem>>, vector<1x8x128xf32>
    %14 = vector.shape_cast %13 : vector<1x8x128xf32> to vector<8x128xf32>
    %15 = vector.shape_cast %12 : vector<8x128xf32> to vector<1x8x128xf32>
    tpu.vector_store %arg5[%c0_7, %c0_8, %c0_9], %15 {strides = array<i32>} : memref<1x8x128xf32, #tpu.memory_space<vmem>>, vector<1x8x128xf32>,
    %16 = tpu.iota {dimensions = array<i32: 1>} : vector<8x128xi32>
    %c128_i32 = arith.constant 128 : i32
    %17 = arith.muli %arg1, %c128_i32 : i32
    %c16_i32 = arith.constant 16 : i32
    %18 = arith.subi %c16_i32, %17 : i32
    %19 = vector.broadcast %18 : i32 to vector<8x128xi32>
    %20 = arith.cmpi slt, %16, %19 : vector<8x128xi32>
    %cst_10 = arith.constant 0.000000e+00 : f32
    %21 = vector.broadcast %cst_10 : f32 to vector<8x128xf32>
    %22 = arith.select %20, %12, %21 : vector<8x128xi1>, vector<8x128xf32>
    %cst_11 = arith.constant dense<0.000000e+00> : vector<8xf32>
    %23 = vector.multi_reduction <add>, %22, %cst_11 [1] : vector<8x128xf32> to vector<8xf32>
    %24 = vector.shape_cast %23 : vector<8xf32> to vector<8x1xf32>
    %c0_12 = arith.constant 0 : index
    %c0_13 = arith.constant 0 : index
    %c0_14 = arith.constant 0 : index
    %c0_15 = arith.constant 0 : index
    %25 = vector.load %arg6[%c0_12, %c0_13, %c0_14, %c0_15] : memref<1x1x8x1xf32, #tpu.memory_space<vmem>>, vector<1x1x8x1xf32>
    %26 = vector.shape_cast %25 : vector<1x1x8x1xf32> to vector<8x1xf32>
    %27 = vector.shape_cast %24 : vector<8x1xf32> to vector<1x1x8x1xf32>
    tpu.vector_store %arg6[%c0_12, %c0_13, %c0_14, %c0_15], %27 {strides = array<i32>} : memref<1x1x8x1xf32, #tpu.memory_space<vmem>>, vector<1x1x8x1xf32>,
    %28 = arith.mulf %22, %22 : vector<8x128xf32>
    %cst_16 = arith.constant dense<0.000000e+00> : vector<8xf32>
    %29 = vector.multi_reduction <add>, %28, %cst_16 [1] : vector<8x128xf32> to vector<8xf32>
    %30 = vector.shape_cast %29 : vector<8xf32> to vector<8x1xf32>
    %c0_17 = arith.constant 0 : index
    %c0_18 = arith.constant 0 : index
    %c0_19 = arith.constant 0 : index
    %c0_20 = arith.constant 0 : index
    %31 = vector.load %arg7[%c0_17, %c0_18, %c0_19, %c0_20] : memref<1x1x8x1xf32, #tpu.memory_space<vmem>>, vector<1x1x8x1xf32>
    %32 = vector.shape_cast %31 : vector<1x1x8x1xf32> to vector<8x1xf32>
    %33 = vector.shape_cast %30 : vector<8x1xf32> to vector<1x1x8x1xf32>
    tpu.vector_store %arg7[%c0_17, %c0_18, %c0_19, %c0_20], %33 {strides = array<i32>} : memref<1x1x8x1xf32, #tpu.memory_space<vmem>>, vector<1x1x8x1xf32>,
    return
  }
  func.func @transform_0(%arg0: i32, %arg1: i32) -> (i32, i32) {
    %c0_i32 = arith.constant 0 : i32
    %c0_i32_0 = arith.constant 0 : i32
    %c0_i32_1 = arith.constant 0 : i32
    return %c0_i32, %c0_i32_0 : i32, i32
  }
  func.func @transform_1(%arg0: i32, %arg1: i32) -> (i32, i32, i32) {
    %c0_i32 = arith.constant 0 : i32
    %c0_i32_0 = arith.constant 0 : i32
    return %arg0, %c0_i32, %arg1 : i32, i32, i32
  }
  func.func @transform_2(%arg0: i32, %arg1: i32) -> (i32, i32, i32) {
    %c1_i32 = arith.constant 1 : i32
    %0 = arith.addi %arg1, %c1_i32 : i32
    %c0_i32 = arith.constant 0 : i32
    %c0_i32_0 = arith.constant 0 : i32
    return %arg0, %c0_i32, %0 : i32, i32, i32
  }
  func.func @transform_3(%arg0: i32, %arg1: i32) -> (i32, i32, i32) {
    %c0_i32 = arith.constant 0 : i32
    %c0_i32_0 = arith.constant 0 : i32
    return %arg0, %c0_i32, %arg1 : i32, i32, i32
  }
  func.func @transform_4(%arg0: i32, %arg1: i32) -> (i32, i32, i32, i32) {
    %c0_i32 = arith.constant 0 : i32
    %c0_i32_0 = arith.constant 0 : i32
    %c0_i32_1 = arith.constant 0 : i32
    return %arg0, %arg1, %c0_i32, %c0_i32_0 : i32, i32, i32, i32
  }
  func.func @transform_5(%arg0: i32, %arg1: i32) -> (i32, i32, i32, i32) {
    %c0_i32 = arith.constant 0 : i32
    %c0_i32_0 = arith.constant 0 : i32
    %c0_i32_1 = arith.constant 0 : i32
    return %arg0, %arg1, %c0_i32, %c0_i32_0 : i32, i32, i32, i32
  }
}

module attributes {stable_mosaic.version = 11 : i64} {
  func.func @_bn_act_kernel(%arg0: i32, %arg1: i32, %arg2: memref<1x8x128xf32, #tpu.memory_space<vmem>>, %arg3: memref<8x1xf32, #tpu.memory_space<vmem>>, %arg4: memref<8x1xf32, #tpu.memory_space<vmem>>, %arg5: memref<1x8x128xf32, #tpu.memory_space<vmem>>, %arg6: memref<1x8x128xf32, #tpu.memory_space<vmem>>) attributes {dimension_semantics = [#tpu.dimension_semantics<parallel>, #tpu.dimension_semantics<parallel>], iteration_bounds = array<i64: 2, 1>, scalar_prefetch = 0 : i64, scratch_operands = 0 : i64, tpu.core_type = #tpu.core_type<tc>, window_params = [{transform_indices = @transform_0, window_bounds = array<i64: 1, 8, 128>}, {pipeline_mode = #tpu.pipeline_mode<synchronous>, transform_indices = @transform_1, window_bounds = array<i64: 8, 1>}, {pipeline_mode = #tpu.pipeline_mode<synchronous>, transform_indices = @transform_2, window_bounds = array<i64: 8, 1>}, {transform_indices = @transform_3, window_bounds = array<i64: 1, 8, 128>}, {transform_indices = @transform_4, window_bounds = array<i64: 1, 8, 128>}]} {
    %c0 = arith.constant 0 : index
    %c0_0 = arith.constant 0 : index
    %c0_1 = arith.constant 0 : index
    %0 = vector.load %arg2[%c0, %c0_0, %c0_1] : memref<1x8x128xf32, #tpu.memory_space<vmem>>, vector<1x8x128xf32>
    %1 = vector.shape_cast %0 : vector<1x8x128xf32> to vector<8x128xf32>
    %c0_2 = arith.constant 0 : index
    %c0_3 = arith.constant 0 : index
    %2 = vector.load %arg3[%c0_2, %c0_3] : memref<8x1xf32, #tpu.memory_space<vmem>>, vector<8x1xf32>
    %3 = vector.broadcast %2 : vector<8x1xf32> to vector<8x128xf32>
    %4 = arith.mulf %1, %3 : vector<8x128xf32>
    %c0_4 = arith.constant 0 : index
    %c0_5 = arith.constant 0 : index
    %5 = vector.load %arg4[%c0_4, %c0_5] : memref<8x1xf32, #tpu.memory_space<vmem>>, vector<8x1xf32>
    %6 = vector.broadcast %5 : vector<8x1xf32> to vector<8x128xf32>
    %7 = arith.addf %4, %6 : vector<8x128xf32>
    %c0_6 = arith.constant 0 : index
    %c0_7 = arith.constant 0 : index
    %c0_8 = arith.constant 0 : index
    %8 = vector.load %arg5[%c0_6, %c0_7, %c0_8] : memref<1x8x128xf32, #tpu.memory_space<vmem>>, vector<1x8x128xf32>
    %9 = vector.shape_cast %8 : vector<1x8x128xf32> to vector<8x128xf32>
    %10 = arith.addf %7, %9 : vector<8x128xf32>
    %cst = arith.constant 0.000000e+00 : f32
    %11 = vector.broadcast %cst : f32 to vector<8x128xf32>
    %12 = arith.maximumf %10, %11 : vector<8x128xf32>
    %c0_9 = arith.constant 0 : index
    %c0_10 = arith.constant 0 : index
    %c0_11 = arith.constant 0 : index
    %13 = vector.load %arg6[%c0_9, %c0_10, %c0_11] : memref<1x8x128xf32, #tpu.memory_space<vmem>>, vector<1x8x128xf32>
    %14 = vector.shape_cast %13 : vector<1x8x128xf32> to vector<8x128xf32>
    %15 = vector.shape_cast %12 : vector<8x128xf32> to vector<1x8x128xf32>
    tpu.vector_store %arg6[%c0_9, %c0_10, %c0_11], %15 {strides = array<i32>} : memref<1x8x128xf32, #tpu.memory_space<vmem>>, vector<1x8x128xf32>,
    return
  }
  func.func @transform_0(%arg0: i32, %arg1: i32) -> (i32, i32, i32) {
    %c0_i32 = arith.constant 0 : i32
    %c0_i32_0 = arith.constant 0 : i32
    return %arg0, %c0_i32, %arg1 : i32, i32, i32
  }
  func.func @transform_1(%arg0: i32, %arg1: i32) -> (i32, i32) {
    %c0_i32 = arith.constant 0 : i32
    %c0_i32_0 = arith.constant 0 : i32
    %c0_i32_1 = arith.constant 0 : i32
    return %c0_i32, %c0_i32_0 : i32, i32
  }
  func.func @transform_2(%arg0: i32, %arg1: i32) -> (i32, i32) {
    %c0_i32 = arith.constant 0 : i32
    %c0_i32_0 = arith.constant 0 : i32
    %c0_i32_1 = arith.constant 0 : i32
    return %c0_i32, %c0_i32_0 : i32, i32
  }
  func.func @transform_3(%arg0: i32, %arg1: i32) -> (i32, i32, i32) {
    %c0_i32 = arith.constant 0 : i32
    %c0_i32_0 = arith.constant 0 : i32
    return %arg0, %c0_i32, %arg1 : i32, i32, i32
  }
  func.func @transform_4(%arg0: i32, %arg1: i32) -> (i32, i32, i32) {
    %c0_i32 = arith.constant 0 : i32
    %c0_i32_0 = arith.constant 0 : i32
    return %arg0, %c0_i32, %arg1 : i32, i32, i32
  }
}

</mosaic_0001>

<llo_original>
// kernel: conv1d_block.3
$region0: #{conv1d_block.3}
  #allocation0 [shape = 'u32[]', space=smem, size = 0x4, offset = 0x4, fixed_abs, tag = 'smem constant byte address 0x4 - core index']
  #allocation1 [shape = 'u32[144,128]{1,0:T(1,128)}', space=vmem, size = 0x12000, scoped, tag = 'internal scratch']
  %s0 = inlined_call_operand.vmem [shape: f32[2,8,128], index: 0, kind: input, shape index: {}, may-alias: {0,4}]
  %s1 = inlined_call_operand.vmem [shape: f32[8,1], index: 1, kind: input, shape index: {}]
  %s2 = inlined_call_operand.vmem [shape: f32[8,1], index: 2, kind: input, shape index: {}]
  %s3 = inlined_call_operand.vmem [shape: f32[2,8,128], index: 3, kind: input, shape index: {}]
  %s4 = inlined_call_operand.vmem [shape: f32[2,8,128], index: 4, kind: output, shape index: {}, may-alias: {0,4}]
  %s5 = sld [smem:[#allocation0]]
  $region49: #{conv1d_block.3} parent=0
    _
  %s7 = ssub.s32 1, %s5
  %s8 = scalar_select 0, %s7, %s5
  loop: start=0, step=1, limit=4
  $region2: #{conv1d_block.3} parent=0 // loop_pre_header
    _
  $region3: #{conv1d_block.3} parent=0 // loop_header
    %s10 = sphi 0, %s14
    %p11 = scmp.ge.s32.totalorder %s10, 4
    %s17 = sphi 0, %s29
    %s18 = sphi 0, %s25
    %s19 = sphi 0, %s17
    %s20 = sphi 0, %s18
    %s21 = sphi 0, %s19
    %s22 = sphi 0, %s20
    %s34 = sphi 0, %s36
    %s37 = sphi 0, %s34
    %s38 = sphi 0, %s37
    %s54 = sphi 0, %s38
    %s58 = sphi 0, %s58
    %s60 = sphi 0, %s58
    %s61 = sphi 0, %s60
    %s75 = sphi 0, %s61
    %s79 = sphi 0, %s79
    %s81 = sphi 0, %s79
    %s82 = sphi 0, %s81
    %s96 = sphi 0, %s82
    %s104 = sphi 0, %s106
    %s107 = sphi 0, %s104
    %s108 = sphi 0, %s107
    %s124 = sphi 0, %s108
    %s132 = sphi 0, %s134
    %s135 = sphi 0, %s132
    %s136 = sphi 0, %s135
    %s152 = sphi 0, %s136
  $region4: #{conv1d_block.3} parent=0 // loop_header_branch
    %13 = sbr.rel (%p11) target = $region8
  $region5: #{conv1d_block.3} parent=0 // loop_body
    %s15 = ssub.s32 %s10, 1
    %s16 = ssub.s32 %s10, 2
    %s23 = sadd.s32 1, %s18
    %p24 = scmp.ge.s32.totalorder %s23, 1
    %s25 = scalar_select %p24, 0, %s23
    %s26 = sadd.s32 1, %s17
    %s27 = scalar_select %p24, %s26, %s17
    %p28 = scmp.ge.s32.totalorder %s27, 2
    %s29 = scalar_select %p28, 0, %s27
    %s30 = ssub.s32 %s17, %s29
    %s31 = ssub.s32 %s18, %s25
    %s32 = sor.u32 %s30, %s31
    %p33 = scmp.eq.s32.totalorder %s32, 0
    %s35 = sadd.s32 %s34, 1
    %s36 = scalar_select %p33, %s34, %s35
    %p39 = pneg %p33
    %p40 = scmp.eq.s32.totalorder %s10, 1
    %p41 = por %p39, %p40
    %p42 = scmp.ne.s32.totalorder %s34, %s37
    %p43 = scmp.eq.s32.totalorder %s10, 0
    %p44 = por %p42, %p43
    %p45 = scmp.ne.s32.totalorder %s34, %s37
    %p46 = scmp.eq.s32.totalorder %s15, 1
    %p47 = por %p45, %p46
    %p48 = scmp.ne.s32.totalorder %s37, %s38
    %p49 = scmp.eq.s32.totalorder %s15, 0
    %p50 = por %p48, %p49
    %p51 = scmp.ne.s32.totalorder %s37, %s38
    %p52 = scmp.eq.s32.totalorder %s16, 1
    %p53 = por %p51, %p52
    %p55 = scmp.ne.s32.totalorder %s38, %s54
    %p56 = scmp.eq.s32.totalorder %s16, 0
    %p57 = por %p55, %p56
    %s59 = sadd.s32 %s58, 1
    %p62 = scmp.eq.s32.totalorder %s10, 1
    %p63 = scmp.ne.s32.totalorder %s58, %s60
    %p64 = scmp.eq.s32.totalorder %s10, 0
    %p65 = por %p63, %p64
    %p66 = scmp.ne.s32.totalorder %s58, %s60
    %p67 = scmp.eq.s32.totalorder %s15, 1
    %p68 = por %p66, %p67
    %p69 = scmp.ne.s32.totalorder %s60, %s61
    %p70 = scmp.eq.s32.totalorder %s15, 0
    %p71 = por %p69, %p70
    %p72 = scmp.ne.s32.totalorder %s60, %s61
    %p73 = scmp.eq.s32.totalorder %s16, 1
    %p74 = por %p72, %p73
    %p76 = scmp.ne.s32.totalorder %s61, %s75
    %p77 = scmp.eq.s32.totalorder %s16, 0
    %p78 = por %p76, %p77
    %s80 = sadd.s32 %s79, 1
    %p83 = scmp.eq.s32.totalorder %s10, 1
    %p84 = scmp.ne.s32.totalorder %s79, %s81
    %p85 = scmp.eq.s32.totalorder %s10, 0
    %p86 = por %p84, %p85
    %p87 = scmp.ne.s32.totalorder %s79, %s81
    %p88 = scmp.eq.s32.totalorder %s15, 1
    %p89 = por %p87, %p88
    %p90 = scmp.ne.s32.totalorder %s81, %s82
    %p91 = scmp.eq.s32.totalorder %s15, 0
    %p92 = por %p90, %p91
    %p93 = scmp.ne.s32.totalorder %s81, %s82
    %p94 = scmp.eq.s32.totalorder %s16, 1
    %p95 = por %p93, %p94
    %p97 = scmp.ne.s32.totalorder %s82, %s96
    %p98 = scmp.eq.s32.totalorder %s16, 0
    %p99 = por %p97, %p98
    %s100 = ssub.s32 %s17, %s29
    %s101 = ssub.s32 %s18, %s25
    %s102 = sor.u32 %s100, %s101
    %p103 = scmp.eq.s32.totalorder %s102, 0
    %s105 = sadd.s32 %s104, 1
    %s106 = scalar_select %p103, %s104, %s105
    %p109 = pneg %p103
    %p110 = scmp.eq.s32.totalorder %s10, 1
    %p111 = por %p109, %p110
    %p112 = scmp.ne.s32.totalorder %s104, %s107
    %p113 = scmp.eq.s32.totalorder %s10, 0
    %p114 = por %p112, %p113
    %p115 = scmp.ne.s32.totalorder %s104, %s107
    %p116 = scmp.eq.s32.totalorder %s15, 1
    %p117 = por %p115, %p116
    %p118 = scmp.ne.s32.totalorder %s107, %s108
    %p119 = scmp.eq.s32.totalorder %s15, 0
    %p120 = por %p118, %p119
    %p121 = scmp.ne.s32.totalorder %s107, %s108
    %p122 = scmp.eq.s32.totalorder %s16, 1
    %p123 = por %p121, %p122
    %p125 = scmp.ne.s32.totalorder %s108, %s124
    %p126 = scmp.eq.s32.totalorder %s16, 0
    %p127 = por %p125, %p126
    %s128 = ssub.s32 %s17, %s29
    %s129 = ssub.s32 %s18, %s25
    %s130 = sor.u32 %s128, %s129
    %p131 = scmp.eq.s32.totalorder %s130, 0
    %s133 = sadd.s32 %s132, 1
    %s134 = scalar_select %p131, %s132, %s133
    %p137 = pneg %p131
    %p138 = scmp.eq.s32.totalorder %s10, 1
    %p139 = por %p137, %p138
    %p140 = scmp.ne.s32.totalorder %s132, %s135
    %p141 = scmp.eq.s32.totalorder %s10, 0
    %p142 = por %p140, %p141
    %p143 = scmp.ne.s32.totalorder %s132, %s135
    %p144 = scmp.eq.s32.totalorder %s15, 1
    %p145 = por %p143, %p144
    %p146 = scmp.ne.s32.totalorder %s135, %s136
    %p147 = scmp.eq.s32.totalorder %s15, 0
    %p148 = por %p146, %p147
    %p149 = scmp.ne.s32.totalorder %s135, %s136
    %p150 = scmp.eq.s32.totalorder %s16, 1
    %p151 = por %p149, %p150
    %p153 = scmp.ne.s32.totalorder %s136, %s152
    %p154 = scmp.eq.s32.totalorder %s16, 0
    %p155 = por %p153, %p154
    %p156 = scmp.le.s32.totalorder 1, %s10
    %p157 = scmp.lt.s32.totalorder %s10, 3
    %p158 = pnand %p156, %p157
    %p159 = pneg %p158
    // Predicated region
    $region9: #{conv1d_block.3} parent=5 // pred_check
      _
    $region10: #{conv1d_block.3} parent=5 // pred_check_branch
      %161 = sbr.rel (%p158) target = $region12
    $region11: #{conv1d_block.3} parent=5 // pred_region
      %s162 = ssub.s32 %s10, 1
      // Predicated region
      $region13: #{conv1d_block.3} parent=11 // pred_check
        %p163 = pneg %p71
      $region14: #{conv1d_block.3} parent=11 // pred_check_branch
        %165 = sbr.rel (%p163) target = $region16
      $region15: #{conv1d_block.3} parent=11 // pred_region
        _
      $region16: #{conv1d_block.3} parent=11 // pred_fallthru
        _
      // Predicated region
      $region17: #{conv1d_block.3} parent=11 // pred_check
        %p166 = pneg %p92
      $region18: #{conv1d_block.3} parent=11 // pred_check_branch
        %168 = sbr.rel (%p166) target = $region20
      $region19: #{conv1d_block.3} parent=11 // pred_region
        _
      $region20: #{conv1d_block.3} parent=11 // pred_fallthru
        _
    $region12: #{conv1d_block.3} parent=5 // pred_fallthru
      _
    %p169 = scmp.lt.s32.totalorder %s10, 2
    // Predicated region
    $region21: #{conv1d_block.3} parent=5 // pred_check
      %p170 = pneg %p169
    $region22: #{conv1d_block.3} parent=5 // pred_check_branch
      %172 = sbr.rel (%p170) target = $region24
    $region23: #{conv1d_block.3} parent=5 // pred_region
      // Predicated region
      $region25: #{conv1d_block.3} parent=23 // pred_check
        %p173 = pneg %p44
      $region26: #{conv1d_block.3} parent=23 // pred_check_branch
        %175 = sbr.rel (%p173) target = $region28
      $region27: #{conv1d_block.3} parent=23 // pred_region
        %p176 = scmp.lt.s32.totalorder %s17, 1
        %s177 = scalar_select %p176, %s17, 1
        %p178 = scmp.lt.s32.totalorder %s18, 0
        %s179 = scalar_select %p178, %s18, 0
        %s180 = sadd.s32 %s179, %s177
        %s181 = smul.addr %s180, 8
        %s182 = scalar_lea.vmem %s0, %s181
      $region28: #{conv1d_block.3} parent=23 // pred_fallthru
        _
      // Predicated region
      $region29: #{conv1d_block.3} parent=23 // pred_check
        %p183 = pneg %p114
      $region30: #{conv1d_block.3} parent=23 // pred_check_branch
        %185 = sbr.rel (%p183) target = $region32
      $region31: #{conv1d_block.3} parent=23 // pred_region
        %p186 = scmp.lt.s32.totalorder %s17, 1
        %s187 = scalar_select %p186, %s17, 1
        %p188 = scmp.lt.s32.totalorder %s18, 0
        %s189 = scalar_select %p188, %s18, 0
        %s190 = sadd.s32 %s189, %s187
        %s191 = smul.addr %s190, 8
        %s192 = scalar_lea.vmem %s3, %s191
      $region32: #{conv1d_block.3} parent=23 // pred_fallthru
        _
    $region24: #{conv1d_block.3} parent=5 // pred_fallthru
      _
    %p193 = scmp.le.s32.totalorder 1, %s10
    %p194 = scmp.lt.s32.totalorder %s10, 3
    %p195 = pnand %p193, %p194
    %p196 = pneg %p195
    // Predicated region
    $region33: #{conv1d_block.3} parent=5 // pred_check
      _
    $region34: #{conv1d_block.3} parent=5 // pred_check_branch
      %198 = sbr.rel (%p195) target = $region36
    $region35: #{conv1d_block.3} parent=5 // pred_region
      %s199 = ssub.s32 %s10, 1
      %p200 = scmp.lt.s32.totalorder %s19, 1
      %s201 = scalar_select %p200, %s19, 1
      %p202 = scmp.lt.s32.totalorder %s20, 0
      %s203 = scalar_select %p202, %s20, 0
      %s204 = sadd.s32 %s203, %s201
      %s205 = smul.addr %s204, 8
      %s206 = scalar_lea.vmem %s0, %s205
      %p207 = pneg %p50
      %p208 = pneg %p47
      %p209 = pneg %p71
      %p210 = pneg %p68
      %p211 = pneg %p92
      %p212 = pneg %p89
      %p213 = scmp.lt.s32.totalorder %s19, 1
      %s214 = scalar_select %p213, %s19, 1
      %p215 = scmp.lt.s32.totalorder %s20, 0
      %s216 = scalar_select %p215, %s20, 0
      %s217 = sadd.s32 %s216, %s214
      %s218 = smul.addr %s217, 8
      %s219 = scalar_lea.vmem %s3, %s218
      %p220 = pneg %p120
      %p221 = pneg %p117
      %p222 = pneg %p148
      %p223 = pneg %p145
      %p224 = scmp.lt.s32.totalorder %s19, 1
      %s225 = scalar_select %p224, %s19, 1
      %p226 = scmp.lt.s32.totalorder %s20, 0
      %s227 = scalar_select %p226, %s20, 0
      %s228 = sadd.s32 %s227, %s225
      %s229 = smul.addr %s228, 8
      %s230 = scalar_lea.vmem %s4, %s229
      %p231 = scmp.lt.s32.totalorder %s19, 1
      %s232 = scalar_select %p231, %s19, 1
      %p233 = scmp.lt.s32.totalorder %s20, 0
      %s234 = scalar_select %p233, %s20, 0
      %s235 = sadd.s32 %s234, %s232
      %s236 = smul.addr %s235, 8
      %s237 = scalar_lea.vmem %s0, %s236
      %p238 = scmp.lt.s32.totalorder %s19, 1
      %s239 = scalar_select %p238, %s19, 1
      %p240 = scmp.lt.s32.totalorder %s20, 0
      %s241 = scalar_select %p240, %s20, 0
      %s242 = sadd.s32 %s241, %s239
      %s243 = smul.addr %s242, 8
      %s244 = scalar_lea.vmem %s3, %s243
      %p245 = scmp.lt.s32.totalorder %s19, 1
      %s246 = scalar_select %p245, %s19, 1
      %p247 = scmp.lt.s32.totalorder %s20, 0
      %s248 = scalar_select %p247, %s20, 0
      %s249 = sadd.s32 %s248, %s246
      %s250 = smul.addr %s249, 8
      %s251 = scalar_lea.vmem %s4, %s250
      %v252 = vld [vmem:[%s237] sm:$0xff]
      %v253 = vld [vmem:[%s1] sm:$0xff]
      %255 = vset.pattern.permute.xlu0 0
      %256 = vperm.xlu0 %255, %v253
      %v257 = vpop.permute.xlu0 %256
      %v259 = vmul.f32 %v252, %v257
      %v260 = vld [vmem:[%s2] sm:$0xff]
      %262 = vset.pattern.permute.xlu0 0
      %263 = vperm.xlu0 %262, %v260
      %v264 = vpop.permute.xlu0 %263
      %v266 = vadd.f32 %v259, %v264
      %v267 = vld [vmem:[%s244] sm:$0xff]
      %v268 = vadd.f32 %v266, %v267
      %v269 = vmax.f32 %v268, 0.0
      %270 = vst [vmem:[%s251] sm:$0xff] %v269
      %p271 = scmp.lt.s32.totalorder %s19, 1
      %s272 = scalar_select %p271, %s19, 1
      %p273 = scmp.lt.s32.totalorder %s20, 0
      %s274 = scalar_select %p273, %s20, 0
      %s275 = sadd.s32 %s274, %s272
      %s276 = smul.addr %s275, 8
      %s277 = scalar_lea.vmem %s4, %s276
      // Predicated region
      $region37: #{conv1d_block.3} parent=35 // pred_check
        %p278 = pneg %p145
      $region38: #{conv1d_block.3} parent=35 // pred_check_branch
        %280 = sbr.rel (%p278) target = $region40
      $region39: #{conv1d_block.3} parent=35 // pred_region
        _
      $region40: #{conv1d_block.3} parent=35 // pred_fallthru
        _
    $region36: #{conv1d_block.3} parent=5 // pred_fallthru
      _
    %p281 = scmp.le.s32.totalorder 2, %s10
    // Predicated region
    $region41: #{conv1d_block.3} parent=5 // pred_check
      %p282 = pneg %p281
    $region42: #{conv1d_block.3} parent=5 // pred_check_branch
      %284 = sbr.rel (%p282) target = $region44
    $region43: #{conv1d_block.3} parent=5 // pred_region
      %s285 = ssub.s32 %s10, 2
      // Predicated region
      $region45: #{conv1d_block.3} parent=43 // pred_check
        %p286 = pneg %p151
      $region46: #{conv1d_block.3} parent=43 // pred_check_branch
        %288 = sbr.rel (%p286) target = $region48
      $region47: #{conv1d_block.3} parent=43 // pred_region
        %p289 = scmp.lt.s32.totalorder %s21, 1
        %s290 = scalar_select %p289, %s21, 1
        %p291 = scmp.lt.s32.totalorder %s22, 0
        %s292 = scalar_select %p291, %s22, 0
        %s293 = sadd.s32 %s292, %s290
        %s294 = smul.addr %s293, 8
        %s295 = scalar_lea.vmem %s4, %s294
      $region48: #{conv1d_block.3} parent=43 // pred_fallthru
        _
    $region44: #{conv1d_block.3} parent=5 // pred_fallthru
      _
  $region6: #{conv1d_block.3} parent=0 // loop_footer
    %s14 = sadd.s32 1, %s10
  $region7: #{conv1d_block.3} parent=0 // loop_footer_branch
    %9 = sbr.rel target = $region3
  $region8: #{conv1d_block.3} parent=0 // loop_exit
    _

// kernel: conv1d_block.2
$region0: #{conv1d_block.2}
  #allocation0 [shape = 'u32[]', space=smem, size = 0x4, offset = 0x4, fixed_abs, tag = 'smem constant byte address 0x4 - core index']
  #allocation1 [shape = 'u32[144,128]{1,0:T(1,128)}', space=vmem, size = 0x12000, scoped, tag = 'internal scratch']
  %s0 = inlined_call_operand.vmem [shape: f32[8,40], index: 0, kind: input, shape index: {}]
  %s1 = inlined_call_operand.vmem [shape: f32[2,8,256], index: 1, kind: input, shape index: {}, may-alias: {1,2}]
  %s2 = inlined_call_operand.vmem [shape: f32[2,8,256], index: 2, kind: input, shape index: {}, may-alias: {1,2}]
  %s3 = inlined_call_operand.vmem [shape: f32[2,8,128], index: 3, kind: output, shape index: {0}]
  %s4 = inlined_call_operand.vmem [shape: f32[2,1,8,1], index: 4, kind: output, shape index: {1}]
  %s5 = inlined_call_operand.vmem [shape: f32[2,1,8,1], index: 5, kind: output, shape index: {2}]
  %6 = xla_tuple %s3, %s4, %s5
  %s7 = sld [smem:[#allocation0]]
  $region61: #{conv1d_block.2} parent=0
    _
  %s9 = ssub.s32 1, %s7
  %s10 = scalar_select 0, %s9, %s7
  loop: start=0, step=1, limit=4
  $region2: #{conv1d_block.2} parent=0 // loop_pre_header
    _
  $region3: #{conv1d_block.2} parent=0 // loop_header
    %s12 = sphi 0, %s16
    %p13 = scmp.ge.s32.totalorder %s12, 4
    %s19 = sphi 0, %s31
    %s20 = sphi 0, %s27
    %s21 = sphi 0, %s19
    %s22 = sphi 0, %s20
    %s23 = sphi 0, %s21
    %s24 = sphi 0, %s22
    %s32 = sphi 0, %s32
    %s34 = sphi 0, %s32
    %s35 = sphi 0, %s34
    %s49 = sphi 0, %s35
    %s57 = sphi 0, %s59
    %s60 = sphi 0, %s57
    %s61 = sphi 0, %s60
    %s77 = sphi 0, %s61
    %s87 = sphi 0, %s89
    %s90 = sphi 0, %s87
    %s91 = sphi 0, %s90
    %s107 = sphi 0, %s91
    %s115 = sphi 0, %s117
    %s118 = sphi 0, %s115
    %s119 = sphi 0, %s118
    %s135 = sphi 0, %s119
    %s143 = sphi 0, %s145
    %s146 = sphi 0, %s143
    %s147 = sphi 0, %s146
    %s163 = sphi 0, %s147
    %s171 = sphi 0, %s173
    %s174 = sphi 0, %s171
    %s175 = sphi 0, %s174
    %s191 = sphi 0, %s175
  $region4: #{conv1d_block.2} parent=0 // loop_header_branch
    %15 = sbr.rel (%p13) target = $region8
  $region5: #{conv1d_block.2} parent=0 // loop_body
    %s17 = ssub.s32 %s12, 1
    %s18 = ssub.s32 %s12, 2
    %s25 = sadd.s32 1, %s20
    %p26 = scmp.ge.s32.totalorder %s25, 1
    %s27 = scalar_select %p26, 0, %s25
    %s28 = sadd.s32 1, %s19
    %s29 = scalar_select %p26, %s28, %s19
    %p30 = scmp.ge.s32.totalorder %s29, 2
    %s31 = scalar_select %p30, 0, %s29
    %s33 = sadd.s32 %s32, 1
    %p36 = scmp.eq.s32.totalorder %s12, 1
    %p37 = scmp.ne.s32.totalorder %s32, %s34
    %p38 = scmp.eq.s32.totalorder %s12, 0
    %p39 = por %p37, %p38
    %p40 = scmp.ne.s32.totalorder %s32, %s34
    %p41 = scmp.eq.s32.totalorder %s17, 1
    %p42 = por %p40, %p41
    %p43 = scmp.ne.s32.totalorder %s34, %s35
    %p44 = scmp.eq.s32.totalorder %s17, 0
    %p45 = por %p43, %p44
    %p46 = scmp.ne.s32.totalorder %s34, %s35
    %p47 = scmp.eq.s32.totalorder %s18, 1
    %p48 = por %p46, %p47
    %p50 = scmp.ne.s32.totalorder %s35, %s49
    %p51 = scmp.eq.s32.totalorder %s18, 0
    %p52 = por %p50, %p51
    %s53 = ssub.s32 %s19, %s31
    %s54 = ssub.s32 %s20, %s27
    %s55 = sor.u32 %s53, %s54
    %p56 = scmp.eq.s32.totalorder %s55, 0
    %s58 = sadd.s32 %s57, 1
    %s59 = scalar_select %p56, %s57, %s58
    %p62 = pneg %p56
    %p63 = scmp.eq.s32.totalorder %s12, 1
    %p64 = por %p62, %p63
    %p65 = scmp.ne.s32.totalorder %s57, %s60
    %p66 = scmp.eq.s32.totalorder %s12, 0
    %p67 = por %p65, %p66
    %p68 = scmp.ne.s32.totalorder %s57, %s60
    %p69 = scmp.eq.s32.totalorder %s17, 1
    %p70 = por %p68, %p69
    %p71 = scmp.ne.s32.totalorder %s60, %s61
    %p72 = scmp.eq.s32.totalorder %s17, 0
    %p73 = por %p71, %p72
    %p74 = scmp.ne.s32.totalorder %s60, %s61
    %p75 = scmp.eq.s32.totalorder %s18, 1
    %p76 = por %p74, %p75
    %p78 = scmp.ne.s32.totalorder %s61, %s77
    %p79 = scmp.eq.s32.totalorder %s18, 0
    %p80 = por %p78, %p79
    %s81 = sadd.s32 %s20, 1
    %s82 = sadd.s32 %s27, 1
    %s83 = ssub.s32 %s19, %s31
    %s84 = ssub.s32 %s81, %s82
    %s85 = sor.u32 %s83, %s84
    %p86 = scmp.eq.s32.totalorder %s85, 0
    %s88 = sadd.s32 %s87, 1
    %s89 = scalar_select %p86, %s87, %s88
    %p92 = pneg %p86
    %p93 = scmp.eq.s32.totalorder %s12, 1
    %p94 = por %p92, %p93
    %p95 = scmp.ne.s32.totalorder %s87, %s90
    %p96 = scmp.eq.s32.totalorder %s12, 0
    %p97 = por %p95, %p96
    %p98 = scmp.ne.s32.totalorder %s87, %s90
    %p99 = scmp.eq.s32.totalorder %s17, 1
    %p100 = por %p98, %p99
    %p101 = scmp.ne.s32.totalorder %s90, %s91
    %p102 = scmp.eq.s32.totalorder %s17, 0
    %p103 = por %p101, %p102
    %p104 = scmp.ne.s32.totalorder %s90, %s91
    %p105 = scmp.eq.s32.totalorder %s18, 1
    %p106 = por %p104, %p105
    %p108 = scmp.ne.s32.totalorder %s91, %s107
    %p109 = scmp.eq.s32.totalorder %s18, 0
    %p110 = por %p108, %p109
    %s111 = ssub.s32 %s19, %s31
    %s112 = ssub.s32 %s20, %s27
    %s113 = sor.u32 %s111, %s112
    %p114 = scmp.eq.s32.totalorder %s113, 0
    %s116 = sadd.s32 %s115, 1
    %s117 = scalar_select %p114, %s115, %s116
    %p120 = pneg %p114
    %p121 = scmp.eq.s32.totalorder %s12, 1
    %p122 = por %p120, %p121
    %p123 = scmp.ne.s32.totalorder %s115, %s118
    %p124 = scmp.eq.s32.totalorder %s12, 0
    %p125 = por %p123, %p124
    %p126 = scmp.ne.s32.totalorder %s115, %s118
    %p127 = scmp.eq.s32.totalorder %s17, 1
    %p128 = por %p126, %p127
    %p129 = scmp.ne.s32.totalorder %s118, %s119
    %p130 = scmp.eq.s32.totalorder %s17, 0
    %p131 = por %p129, %p130
    %p132 = scmp.ne.s32.totalorder %s118, %s119
    %p133 = scmp.eq.s32.totalorder %s18, 1
    %p134 = por %p132, %p133
    %p136 = scmp.ne.s32.totalorder %s119, %s135
    %p137 = scmp.eq.s32.totalorder %s18, 0
    %p138 = por %p136, %p137
    %s139 = ssub.s32 %s19, %s31
    %s140 = ssub.s32 %s20, %s27
    %s141 = sor.u32 %s139, %s140
    %p142 = scmp.eq.s32.totalorder %s141, 0
    %s144 = sadd.s32 %s143, 1
    %s145 = scalar_select %p142, %s143, %s144
    %p148 = pneg %p142
    %p149 = scmp.eq.s32.totalorder %s12, 1
    %p150 = por %p148, %p149
    %p151 = scmp.ne.s32.totalorder %s143, %s146
    %p152 = scmp.eq.s32.totalorder %s12, 0
    %p153 = por %p151, %p152
    %p154 = scmp.ne.s32.totalorder %s143, %s146
    %p155 = scmp.eq.s32.totalorder %s17, 1
    %p156 = por %p154, %p155
    %p157 = scmp.ne.s32.totalorder %s146, %s147
    %p158 = scmp.eq.s32.totalorder %s17, 0
    %p159 = por %p157, %p158
    %p160 = scmp.ne.s32.totalorder %s146, %s147
    %p161 = scmp.eq.s32.totalorder %s18, 1
    %p162 = por %p160, %p161
    %p164 = scmp.ne.s32.totalorder %s147, %s163
    %p165 = scmp.eq.s32.totalorder %s18, 0
    %p166 = por %p164, %p165
    %s167 = ssub.s32 %s19, %s31
    %s168 = ssub.s32 %s20, %s27
    %s169 = sor.u32 %s167, %s168
    %p170 = scmp.eq.s32.totalorder %s169, 0
    %s172 = sadd.s32 %s171, 1
    %s173 = scalar_select %p170, %s171, %s172
    %p176 = pneg %p170
    %p177 = scmp.eq.s32.totalorder %s12, 1
    %p178 = por %p176, %p177
    %p179 = scmp.ne.s32.totalorder %s171, %s174
    %p180 = scmp.eq.s32.totalorder %s12, 0
    %p181 = por %p179, %p180
    %p182 = scmp.ne.s32.totalorder %s171, %s174
    %p183 = scmp.eq.s32.totalorder %s17, 1
    %p184 = por %p182, %p183
    %p185 = scmp.ne.s32.totalorder %s174, %s175
    %p186 = scmp.eq.s32.totalorder %s17, 0
    %p187 = por %p185, %p186
    %p188 = scmp.ne.s32.totalorder %s174, %s175
    %p189 = scmp.eq.s32.totalorder %s18, 1
    %p190 = por %p188, %p189
    %p192 = scmp.ne.s32.totalorder %s175, %s191
    %p193 = scmp.eq.s32.totalorder %s18, 0
    %p194 = por %p192, %p193
    %p195 = scmp.le.s32.totalorder 1, %s12
    %p196 = scmp.lt.s32.totalorder %s12, 3
    %p197 = pnand %p195, %p196
    %p198 = pneg %p197
    // Predicated region
    $region9: #{conv1d_block.2} parent=5 // pred_check
      _
    $region10: #{conv1d_block.2} parent=5 // pred_check_branch
      %200 = sbr.rel (%p197) target = $region12
    $region11: #{conv1d_block.2} parent=5 // pred_region
      %s201 = ssub.s32 %s12, 1
      // Predicated region
      $region13: #{conv1d_block.2} parent=11 // pred_check
        %p202 = pneg %p45
      $region14: #{conv1d_block.2} parent=11 // pred_check_branch
        %204 = sbr.rel (%p202) target = $region16
      $region15: #{conv1d_block.2} parent=11 // pred_region
        _
      $region16: #{conv1d_block.2} parent=11 // pred_fallthru
        _
    $region12: #{conv1d_block.2} parent=5 // pred_fallthru
      _
    %p205 = scmp.lt.s32.totalorder %s12, 2
    // Predicated region
    $region17: #{conv1d_block.2} parent=5 // pred_check
      %p206 = pneg %p205
    $region18: #{conv1d_block.2} parent=5 // pred_check_branch
      %208 = sbr.rel (%p206) target = $region20
    $region19: #{conv1d_block.2} parent=5 // pred_region
      // Predicated region
      $region21: #{conv1d_block.2} parent=19 // pred_check
        %p209 = pneg %p67
      $region22: #{conv1d_block.2} parent=19 // pred_check_branch
        %211 = sbr.rel (%p209) target = $region24
      $region23: #{conv1d_block.2} parent=19 // pred_region
        %p212 = scmp.lt.s32.totalorder %s19, 1
        %s213 = scalar_select %p212, %s19, 1
        %p214 = scmp.lt.s32.totalorder %s20, 1
        %s215 = scalar_select %p214, %s20, 1
        %s216 = smul.addr %s213, 2
        %s217 = sadd.s32 %s215, %s216
        %s218 = smul.addr %s217, 8
        %s219 = scalar_lea.vmem %s1, %s218
      $region24: #{conv1d_block.2} parent=19 // pred_fallthru
        _
      // Predicated region
      $region25: #{conv1d_block.2} parent=19 // pred_check
        %p220 = pneg %p97
      $region26: #{conv1d_block.2} parent=19 // pred_check_branch
        %222 = sbr.rel (%p220) target = $region28
      $region27: #{conv1d_block.2} parent=19 // pred_region
        %s223 = sadd.s32 %s20, 1
        %p224 = scmp.lt.s32.totalorder %s19, 1
        %s225 = scalar_select %p224, %s19, 1
        %p226 = scmp.lt.s32.totalorder %s223, 1
        %s227 = scalar_select %p226, %s223, 1
        %s228 = smul.addr %s225, 2
        %s229 = sadd.s32 %s227, %s228
        %s230 = smul.addr %s229, 8
        %s231 = scalar_lea.vmem %s2, %s230
        %s232 = sadd.s32 %s20, 1
      $region28: #{conv1d_block.2} parent=19 // pred_fallthru
        _
    $region20: #{conv1d_block.2} parent=5 // pred_fallthru
      _
    %p233 = scmp.le.s32.totalorder 1, %s12
    %p234 = scmp.lt.s32.totalorder %s12, 3
    %p235 = pnand %p233, %p234
    %p236 = pneg %p235
    // Predicated region
    $region29: #{conv1d_block.2} parent=5 // pred_check
      _
    $region30: #{conv1d_block.2} parent=5 // pred_check_branch
      %238 = sbr.rel (%p235) target = $region32
    $region31: #{conv1d_block.2} parent=5 // pred_region
      %s239 = ssub.s32 %s12, 1
      %p240 = pneg %p45
      %p241 = pneg %p42
      %p242 = scmp.lt.s32.totalorder %s21, 1
      %s243 = scalar_select %p242, %s21, 1
      %p244 = scmp.lt.s32.totalorder %s22, 1
      %s245 = scalar_select %p244, %s22, 1
      %s246 = smul.addr %s243, 2
      %s247 = sadd.s32 %s245, %s246
      %s248 = smul.addr %s247, 8
      %s249 = scalar_lea.vmem %s1, %s248
      %p250 = pneg %p73
      %p251 = pneg %p70
      %s252 = sadd.s32 %s22, 1
      %p253 = scmp.lt.s32.totalorder %s21, 1
      %s254 = scalar_select %p253, %s21, 1
      %p255 = scmp.lt.s32.totalorder %s252, 1
      %s256 = scalar_select %p255, %s252, 1
      %s257 = smul.addr %s254, 2
      %s258 = sadd.s32 %s256, %s257
      %s259 = smul.addr %s258, 8
      %s260 = scalar_lea.vmem %s2, %s259
      %p261 = pneg %p103
      %p262 = pneg %p100
      %p263 = pneg %p131
      %p264 = pneg %p128
      %p265 = scmp.lt.s32.totalorder %s21, 1
      %s266 = scalar_select %p265, %s21, 1
      %p267 = scmp.lt.s32.totalorder %s22, 0
      %s268 = scalar_select %p267, %s22, 0
      %s269 = sadd.s32 %s268, %s266
      %s270 = smul.addr %s269, 8
      %s271 = scalar_lea.vmem %s3, %s270
      %p272 = pneg %p159
      %p273 = pneg %p156
      %p274 = scmp.lt.s32.totalorder %s21, 1
      %s275 = scalar_select %p274, %s21, 1
      %p276 = scmp.lt.s32.totalorder %s22, 0
      %s277 = scalar_select %p276, %s22, 0
      %s278 = sadd.s32 %s277, %s275
      %s279 = smul.addr %s278, 8
      %s280 = scalar_lea.vmem %s4, %s279
      %p281 = pneg %p187
      %p282 = pneg %p184
      %p283 = scmp.lt.s32.totalorder %s21, 1
      %s284 = scalar_select %p283, %s21, 1
      %p285 = scmp.lt.s32.totalorder %s22, 0
      %s286 = scalar_select %p285, %s22, 0
      %s287 = sadd.s32 %s286, %s284
      %s288 = smul.addr %s287, 8
      %s289 = scalar_lea.vmem %s5, %s288
      %p290 = scmp.lt.s32.totalorder %s21, 1
      %s291 = scalar_select %p290, %s21, 1
      %p292 = scmp.lt.s32.totalorder %s22, 1
      %s293 = scalar_select %p292, %s22, 1
      %s294 = smul.addr %s291, 2
      %s295 = sadd.s32 %s293, %s294
      %s296 = smul.addr %s295, 8
      %s297 = scalar_lea.vmem %s1, %s296
      %s298 = sadd.s32 %s22, 1
      %p299 = scmp.lt.s32.totalorder %s21, 1
      %s300 = scalar_select %p299, %s21, 1
      %p301 = scmp.lt.s32.totalorder %s298, 1
      %s302 = scalar_select %p301, %s298, 1
      %s303 = smul.addr %s300, 2
      %s304 = sadd.s32 %s302, %s303
      %s305 = smul.addr %s304, 8
      %s306 = scalar_lea.vmem %s2, %s305
      %s307 = sadd.s32 %s22, 1
      %p308 = scmp.lt.s32.totalorder %s21, 1
      %s309 = scalar_select %p308, %s21, 1
      %p310 = scmp.lt.s32.totalorder %s22, 0
      %s311 = scalar_select %p310, %s22, 0
      %s312 = sadd.s32 %s311, %s309
      %s313 = smul.addr %s312, 8
      %s314 = scalar_lea.vmem %s3, %s313
      %p315 = scmp.lt.s32.totalorder %s21, 1
      %s316 = scalar_select %p315, %s21, 1
      %p317 = scmp.lt.s32.totalorder %s22, 0
      %s318 = scalar_select %p317, %s22, 0
      %s319 = sadd.s32 %s318, %s316
      %s320 = smul.addr %s319, 8
      %s321 = scalar_lea.vmem %s4, %s320
      %p322 = scmp.lt.s32.totalorder %s21, 1
      %s323 = scalar_select %p322, %s21, 1
      %p324 = scmp.lt.s32.totalorder %s22, 0
      %s325 = scalar_select %p324, %s22, 0
      %s326 = sadd.s32 %s325, %s323
      %s327 = smul.addr %s326, 8
      %s328 = scalar_lea.vmem %s5, %s327
      %v329 = vld [vmem:[%s297] sm:$0xff]
      %v330 = vld [vmem:[%s306] sm:$0xff]
      %333 = vrot.lane.b32.xlu0 %v329, 127
      %v334 = vpop.permute.xlu0 %333
      %335 = vrot.lane.b32.xlu0 %v330, 127
      %v336 = vpop.permute.xlu0 %335
      %vm337 = vcmask 1039360
      %v338 = vsel %vm337, %v334, %v336
      %340 = vrot.lane.b32.xlu0 %v329, 126
      %v341 = vpop.permute.xlu0 %340
      %342 = vrot.lane.b32.xlu0 %v330, 126
      %v343 = vpop.permute.xlu0 %342
      %vm344 = vcmask 1031168
      %v345 = vsel %vm344, %v341, %v343
      %347 = vrot.lane.b32.xlu0 %v329, 125
      %v348 = vpop.permute.xlu0 %347
      %349 = vrot.lane.b32.xlu0 %v330, 125
      %v350 = vpop.permute.xlu0 %349
      %vm351 = vcmask 1022976
      %v352 = vsel %vm351, %v348, %v350
      %354 = vrot.lane.b32.xlu0 %v329, 124
      %v355 = vpop.permute.xlu0 %354
      %356 = vrot.lane.b32.xlu0 %v330, 124
      %v357 = vpop.permute.xlu0 %356
      %vm358 = vcmask 1014784
      %v359 = vsel %vm358, %v355, %v357
      %v361 = vld [vmem:[%s0] sm:$0xff]
      %vm362 = vcmask 326656
      %v364 = vsel %vm362, %v361, 0
      %366 = vmatprep.subr.mxu0 0.0
      %367 = vmatpush1.msra.mxu0 0.0
      %368 = vmatprep.subr.mxu0 0.0
      %369 = vmatpush1.msra.mxu0 0.0
      %370 = vmatprep.subr.mxu0 0.0
      %371 = vmatpush1.msra.mxu0 0.0
      %372 = vmatprep.subr.mxu0 0.0
      %373 = vmatpush1.msra.mxu0 0.0
      %374 = vmatprep.subr.mxu0 0.0
      %375 = vmatpush1.msra.mxu0 0.0
      %376 = vmatprep.subr.mxu0 0.0
      %377 = vmatpush1.msra.mxu0 0.0
      %378 = vmatprep.subr.mxu0 0.0
      %379 = vmatpush1.msra.mxu0 0.0
      %380 = vmatprep.subr.mxu0 0.0
      %381 = vmatpush1.msra.mxu0 0.0
      %382 = vmatprep.subr.mxu0 0.0
      %383 = vmatpush1.msra.mxu0 0.0
      %384 = vmatprep.subr.mxu0 0.0
      %385 = vmatpush1.msra.mxu0 0.0
      %386 = vmatprep.subr.mxu0 0.0
      %387 = vmatpush1.msra.mxu0 0.0
      %388 = vmatprep.subr.mxu0 0.0
      %389 = vmatpush1.msra.mxu0 %v359
      %390 = vmatprep.subr.mxu0 0.0
      %391 = vmatpush1.msra.mxu0 %v352
      %392 = vmatprep.subr.mxu0 0.0
      %393 = vmatpush1.msra.mxu0 %v345
      %394 = vmatprep.subr.mxu0 0.0
      %395 = vmatpush1.msra.mxu0 %v338
      %396 = vmatprep.subr.mxu0 0.0
      %397 = vmatpush1.msra.mxu0 %v329
      %398 = vmatprep.subr.mxu0 0.0
      %399 = vmatpush2.msra.mxu0 0.0
      %400 = vmatprep.subr.mxu0 0.0
      %401 = vmatpush2.msra.mxu0 0.0
      %402 = vmatprep.subr.mxu0 0.0
      %403 = vmatpush2.msra.mxu0 0.0
      %404 = vmatprep.subr.mxu0 0.0
      %405 = vmatpush2.msra.mxu0 0.0
      %406 = vmatprep.subr.mxu0 0.0
      %407 = vmatpush2.msra.mxu0 0.0
      %408 = vmatprep.subr.mxu0 0.0
      %409 = vmatpush2.msra.mxu0 0.0
      %410 = vmatprep.subr.mxu0 0.0
      %411 = vmatpush2.msra.mxu0 0.0
      %412 = vmatprep.subr.mxu0 0.0
      %413 = vmatpush2.msra.mxu0 0.0
      %414 = vmatprep.subr.mxu0 0.0
      %415 = vmatpush2.msra.mxu0 0.0
      %416 = vmatprep.subr.mxu0 0.0
      %417 = vmatpush2.msra.mxu0 0.0
      %418 = vmatprep.subr.mxu0 0.0
      %419 = vmatpush2.msra.mxu0 0.0
      %420 = vmatprep.subr.mxu0 0.0
      %421 = vmatpush2.msra.mxu0 0.0
      %422 = vmatprep.subr.mxu0 0.0
      %423 = vmatpush2.msra.mxu0 0.0
      %424 = vmatprep.subr.mxu0 0.0
      %425 = vmatpush2.msra.mxu0 0.0
      %426 = vmatprep.subr.mxu0 0.0
      %427 = vmatpush2.msra.mxu0 0.0
      %428 = vmatprep.subr.mxu0 0.0
      %429 = vmatpush2.msra.mxu0 0.0
      %430 = vmatprep.mubr.f32.mxu0 0.0
      %431 = vmatmul.mubr.f32.gmra.mxu0 %v364
      %v432 = vpop.f32.mrf.mxu0
      %v433 = vadd.f32 0.0, %v432
      %v434 = vpop.f32.mrf.mxu0
      %435 = vdwg.mxu0
      %436 = vst [vmem:[%s314] sm:$0xff] %v433
      %v437 = vlaneseq
      %v438 = vand.u32 %v437, 127
      %s439 = smul.u32 %s22, 128
      %s440 = ssub.s32 16, %s439
      %v441 = vstv %s440
      %vm442 = vcmp.lt.s32.totalorder %v438, %v441
      %v443 = vsel %vm442, %v433, 0.0
      %444 = vadd.xlane.f32.xlu0 %v443
      %v445 = vpop.xlane.xlu0 %444
      %vm446 = vcmask 7168
      %447 = vst.msk [vmem:[%s321] sm:$0xff] %vm446, %v445
      %v448 = vmul.f32 %v443, %v443
      %449 = vadd.xlane.f32.xlu0 %v448
      %v450 = vpop.xlane.xlu0 %449
      %451 = vst.msk [vmem:[%s328] sm:$0xff] %vm446, %v450
      %p452 = scmp.lt.s32.totalorder %s21, 1
      %s453 = scalar_select %p452, %s21, 1
      %p454 = scmp.lt.s32.totalorder %s22, 0
      %s455 = scalar_select %p454, %s22, 0
      %s456 = sadd.s32 %s455, %s453
      %s457 = smul.addr %s456, 8
      %s458 = scalar_lea.vmem %s3, %s457
      %p459 = scmp.lt.s32.totalorder %s21, 1
      %s460 = scalar_select %p459, %s21, 1
      %p461 = scmp.lt.s32.totalorder %s22, 0
      %s462 = scalar_select %p461, %s22, 0
      %s463 = sadd.s32 %s462, %s460
      %s464 = smul.addr %s463, 8
      %s465 = scalar_lea.vmem %s4, %s464
      %p466 = scmp.lt.s32.totalorder %s21, 1
      %s467 = scalar_select %p466, %s21, 1
      %p468 = scmp.lt.s32.totalorder %s22, 0
      %s469 = scalar_select %p468, %s22, 0
      %s470 = sadd.s32 %s469, %s467
      %s471 = smul.addr %s470, 8
      %s472 = scalar_lea.vmem %s5, %s471
      // Predicated region
      $region33: #{conv1d_block.2} parent=31 // pred_check
        %p473 = pneg %p128
      $region34: #{conv1d_block.2} parent=31 // pred_check_branch
        %475 = sbr.rel (%p473) target = $region36
      $region35: #{conv1d_block.2} parent=31 // pred_region
        _
      $region36: #{conv1d_block.2} parent=31 // pred_fallthru
        _
      // Predicated region
      $region37: #{conv1d_block.2} parent=31 // pred_check
        %p476 = pneg %p156
      $region38: #{conv1d_block.2} parent=31 // pred_check_branch
        %478 = sbr.rel (%p476) target = $region40
      $region39: #{conv1d_block.2} parent=31 // pred_region
        _
      $region40: #{conv1d_block.2} parent=31 // pred_fallthru
        _
      // Predicated region
      $region41: #{conv1d_block.2} parent=31 // pred_check
        %p479 = pneg %p184
      $region42: #{conv1d_block.2} parent=31 // pred_check_branch
        %481 = sbr.rel (%p479) target = $region44
      $region43: #{conv1d_block.2} parent=31 // pred_region
        _
      $region44: #{conv1d_block.2} parent=31 // pred_fallthru
        _
    $region32: #{conv1d_block.2} parent=5 // pred_fallthru
      _
    %p482 = scmp.le.s32.totalorder 2, %s12
    // Predicated region
    $region45: #{conv1d_block.2} parent=5 // pred_check
      %p483 = pneg %p482
    $region46: #{conv1d_block.2} parent=5 // pred_check_branch
      %485 = sbr.rel (%p483) target = $region48
    $region47: #{conv1d_block.2} parent=5 // pred_region
      %s486 = ssub.s32 %s12, 2
      // Predicated region
      $region49: #{conv1d_block.2} parent=47 // pred_check
        %p487 = pneg %p134
      $region50: #{conv1d_block.2} parent=47 // pred_check_branch
        %489 = sbr.rel (%p487) target = $region52
      $region51: #{conv1d_block.2} parent=47 // pred_region
        %p490 = scmp.lt.s32.totalorder %s23, 1
        %s491 = scalar_select %p490, %s23, 1
        %p492 = scmp.lt.s32.totalorder %s24, 0
        %s493 = scalar_select %p492, %s24, 0
        %s494 = sadd.s32 %s493, %s491
        %s495 = smul.addr %s494, 8
        %s496 = scalar_lea.vmem %s3, %s495
      $region52: #{conv1d_block.2} parent=47 // pred_fallthru
        _
      // Predicated region
      $region53: #{conv1d_block.2} parent=47 // pred_check
        %p497 = pneg %p162
      $region54: #{conv1d_block.2} parent=47 // pred_check_branch
        %499 = sbr.rel (%p497) target = $region56
      $region55: #{conv1d_block.2} parent=47 // pred_region
        %p500 = scmp.lt.s32.totalorder %s23, 1
        %s501 = scalar_select %p500, %s23, 1
        %p502 = scmp.lt.s32.totalorder %s24, 0
        %s503 = scalar_select %p502, %s24, 0
        %s504 = sadd.s32 %s503, %s501
        %s505 = smul.addr %s504, 8
        %s506 = scalar_lea.vmem %s4, %s505
      $region56: #{conv1d_block.2} parent=47 // pred_fallthru
        _
      // Predicated region
      $region57: #{conv1d_block.2} parent=47 // pred_check
        %p507 = pneg %p190
      $region58: #{conv1d_block.2} parent=47 // pred_check_branch
        %509 = sbr.rel (%p507) target = $region60
      $region59: #{conv1d_block.2} parent=47 // pred_region
        %p510 = scmp.lt.s32.totalorder %s23, 1
        %s511 = scalar_select %p510, %s23, 1
        %p512 = scmp.lt.s32.totalorder %s24, 0
        %s513 = scalar_select %p512, %s24, 0
        %s514 = sadd.s32 %s513, %s511
        %s515 = smul.addr %s514, 8
        %s516 = scalar_lea.vmem %s5, %s515
      $region60: #{conv1d_block.2} parent=47 // pred_fallthru
        _
    $region48: #{conv1d_block.2} parent=5 // pred_fallthru
      _
  $region6: #{conv1d_block.2} parent=0 // loop_footer
    %s16 = sadd.s32 1, %s12
  $region7: #{conv1d_block.2} parent=0 // loop_footer_branch
    %11 = sbr.rel target = $region3
  $region8: #{conv1d_block.2} parent=0 // loop_exit
    _

</llo_original>
